<compile_context>
chip_gen: v7x
topology: tpu7x:2x2x1
jax: 0.10.0
libtpu: 0.0.40
codegen_flags: <defaults>
</compile_context>

<pallas_src>
from functools import partial

import jax
import jax.numpy as jnp
from jax import lax
from jax.experimental import pallas as pl
from jax.experimental.pallas import tpu as pltpu

HIDDEN = 128      # hidden width of both inner layers (matches the module)
LANE = 128        # TPU lane width
_TILE_CAP = 2048  # max batch-tile rows (x+out double-buffered << VMEM limits)


def _cdiv(a, b):
    return (a + b - 1) // b


def _round_up(n, m):
    return ((n + m - 1) // m) * m


def _tile_rows(batch):
    """Batch tile: track B closely, cap at 2048, >=2 tiles at rollout sizes."""
    min_tiles = 2 if batch >= 256 else 1          # keep v7x's 2nd TC busy
    n_tiles = max(min_tiles, _cdiv(batch, _TILE_CAP))
    return _round_up(_cdiv(batch, n_tiles), 8)


def _mlp_kernel(x_ref, w1_ref, w23_ref, b_ref, o_ref, *, n_act):
    """Fused 3-layer MLP: (Linear+LeakyReLU) -> (Linear+ReLU) -> Linear.

    x_ref:   (TILE_B, nsv_pad) bf16  -- state features (bf16 cast done on host)
    w1_ref:  (nsv_pad, 128)   bf16   -- layer-1 weight (resident)
    w23_ref: (2, 128, 128)    bf16   -- [w2, w3_padded_to_128_out] (resident)
    b_ref:   (3, 1, 128)      f32    -- [b1, b2, b3_padded] (resident)
    o_ref:   (TILE_B, n_act)  f32    -- logits (masked store, n_act lanes)
    """
    # Linear 1 + LeakyReLU(0.01)  (bf16 MXU operands, f32 accumulate)
    h1 = jnp.dot(x_ref[...], w1_ref[...],
                 preferred_element_type=jnp.float32) + b_ref[0]
    h1 = jnp.maximum(h1, 0.01 * h1)

    # Linear 2 + ReLU
    h2 = jnp.dot(h1.astype(jnp.bfloat16), w23_ref[0],
                 preferred_element_type=jnp.float32) + b_ref[1]
    h2 = jnp.maximum(h2, 0.0)

    # Linear 3 (logits) -- compute full 128 lanes, store only the live columns.
    h3 = jnp.dot(h2.astype(jnp.bfloat16), w23_ref[1],
                 preferred_element_type=jnp.float32) + b_ref[2]
    o_ref[...] = h3[:, :n_act]


def pack_params(params):
    """One-time pack of the per-layer params into 3 resident kernel inputs."""
    w1, b1 = params["w1"], params["b1"]
    w2, b2 = params["w2"], params["b2"]
    w3, b3 = params["w3"], params["b3"]
    nsv = w1.shape[0]
    n_act = w3.shape[1]
    assert w1.shape[1] == HIDDEN and w2.shape == (HIDDEN, HIDDEN)
    assert n_act <= LANE  # Coup action space is small; >128 would need out-tiling

    nsv_pad = _round_up(nsv, 16)  # bf16 sublane alignment for the w1 slab
    w1p = jnp.zeros((nsv_pad, HIDDEN), jnp.float32).at[:nsv, :].set(w1)
    w3p = jnp.zeros((HIDDEN, LANE), jnp.float32).at[:, :n_act].set(w3)
    b3p = jnp.zeros((LANE,), jnp.float32).at[:n_act].set(b3.reshape(-1))

    w1p = w1p.astype(jnp.bfloat16)                                   # (nsv_pad,128)
    w23 = jnp.stack([w2, w3p]).astype(jnp.bfloat16)                  # (2,128,128)
    b_packed = jnp.stack([b1.reshape(1, -1),
                          b2.reshape(1, -1),
                          b3p.reshape(1, -1)]).astype(jnp.float32)   # (3,1,128)
    return {"w1": w1p, "w23": w23, "b": b_packed,
            "num_state_vars": nsv, "num_actions": n_act}


def policy_network_forward(x, packed):
    """x: (B, numStateVars) f32. Returns (B, numActionOptions) f32 logits."""
    B, nsv = x.shape
    n_act = packed["num_actions"]
    nsv_pad = packed["w1"].shape[0]

    tile_b = _tile_rows(B)
    b_pad = _round_up(B, tile_b)
    n_tiles = b_pad // tile_b

    # Host-side bf16 cast (identical rounding to an in-kernel astype); only
    # pad when strictly necessary (batch to a tile multiple, nsv to nsv_pad).
    xb = x.astype(jnp.bfloat16)
    if b_pad != B or nsv_pad != nsv:
        xb = jnp.zeros((b_pad, nsv_pad), jnp.bfloat16).at[:B, :nsv].set(xb)

    out = pl.pallas_call(
        partial(_mlp_kernel, n_act=n_act),
        out_shape=jax.ShapeDtypeStruct((b_pad, n_act), jnp.float32),
        grid=(n_tiles,),
        in_specs=[
            pl.BlockSpec((tile_b, nsv_pad), lambda i: (i, 0)),        # x tile
            pl.BlockSpec((nsv_pad, HIDDEN), lambda i: (0, 0)),        # w1 (resident)
            pl.BlockSpec((2, HIDDEN, LANE), lambda i: (0, 0, 0)),     # w2/w3 (resident)
            pl.BlockSpec((3, 1, LANE), lambda i: (0, 0, 0)),          # biases (resident)
        ],
        out_specs=pl.BlockSpec((tile_b, n_act), lambda i: (i, 0)),    # logits
        compiler_params=pltpu.CompilerParams(
            dimension_semantics=("parallel",)),
    )(xb, packed["w1"], packed["w23"], packed["b"])

    return out[:B] if b_pad != B else out


def init_params(key, num_state_vars, num_action_options, hidden=HIDDEN):
    """Deterministic synthetic init (uniform, PyTorch-Linear-style bounds)."""
    ks = jax.random.split(key, 6)

    def linear(kw, kb, fan_in, fan_out):
        bound = 1.0 / jnp.sqrt(jnp.float32(fan_in))
        w = jax.random.uniform(kw, (fan_in, fan_out), jnp.float32, -bound, bound)
        b = jax.random.uniform(kb, (fan_out,), jnp.float32, -bound, bound)
        return w, b

    w1, b1 = linear(ks[0], ks[1], num_state_vars, hidden)
    w2, b2 = linear(ks[2], ks[3], hidden, hidden)
    w3, b3 = linear(ks[4], ks[5], hidden, num_action_options)
    return {"w1": w1, "b1": b1, "w2": w2, "b2": b2, "w3": w3, "b3": b3}


def _ref_forward_bf16(x, packed):
    """f32 reference that mirrors the kernel's bf16 operand rounding."""
    hi = lax.Precision.HIGHEST
    nsv = x.shape[1]
    w1 = packed["w1"].astype(jnp.float32)[:nsv, :]
    w23 = packed["w23"].astype(jnp.float32)
    b = packed["b"][:, 0, :]
    xq = x.astype(jnp.bfloat16).astype(jnp.float32)
    h1 = jnp.dot(xq, w1, precision=hi) + b[0]
    h1 = jnp.maximum(h1, 0.01 * h1)
    h1q = h1.astype(jnp.bfloat16).astype(jnp.float32)
    h2 = jnp.maximum(jnp.dot(h1q, w23[0], precision=hi) + b[1], 0.0)
    h2q = h2.astype(jnp.bfloat16).astype(jnp.float32)
    h3 = jnp.dot(h2q, w23[1], precision=hi) + b[2]
    return h3[:, :packed["num_actions"]]


def _ref_forward_f32(x, params):
    """Pure f32 reference of the original PyTorch math (raw params)."""
    hi = lax.Precision.HIGHEST
    h1 = jnp.dot(x, params["w1"], precision=hi) + params["b1"]
    h1 = jnp.maximum(h1, 0.01 * h1)
    h2 = jnp.maximum(jnp.dot(h1, params["w2"], precision=hi) + params["b2"], 0.0)
    return jnp.dot(h2, params["w3"], precision=hi) + params["b3"]


if __name__ == "__main__":
    # Small shapes consistent with the module: state vector -> action logits.
    batch = 8
    num_state_vars = 32
    num_action_options = 16

    key = jax.random.PRNGKey(0)
    k_x, k_p = jax.random.split(key)
    x = jax.random.normal(k_x, (batch, num_state_vars), dtype=jnp.float32)

    params = init_params(k_p, num_state_vars, num_action_options)
    packed = pack_params(params)

    out = policy_network_forward(x, packed)
    out = jax.block_until_ready(out)
    assert out.shape == (batch, num_action_options)

    # Tight check against a reference that uses the same bf16 operand rounding.
    ref_bf16 = _ref_forward_bf16(x, packed)
    assert jnp.allclose(out, ref_bf16, atol=1e-4, rtol=1e-4), (
        jnp.max(jnp.abs(out - ref_bf16)))

    # Loose check against the exact f32 PyTorch-equivalent math.
    ref_f32 = _ref_forward_f32(x, params)
    assert jnp.allclose(out, ref_f32, atol=5e-2, rtol=5e-2), (
        jnp.max(jnp.abs(out - ref_f32)))

    print("KERNEL_OK")
</pallas_src>

<mosaic_0001>
module attributes {stable_mosaic.version = 11 : i64} {
  func.func @_mlp_kernel(%arg0: i32, %arg1: memref<8x32xbf16, #tpu.memory_space<vmem>>, %arg2: memref<32x128xbf16, #tpu.memory_space<vmem>>, %arg3: memref<2x128x128xbf16, #tpu.memory_space<vmem>>, %arg4: memref<3x1x128xf32, #tpu.memory_space<vmem>>, %arg5: memref<8x16xf32, #tpu.memory_space<vmem>>) attributes {dimension_semantics = [#tpu.dimension_semantics<parallel>], iteration_bounds = array<i64: 1>, scalar_prefetch = 0 : i64, scratch_operands = 0 : i64, tpu.core_type = #tpu.core_type<tc>, window_params = [{transform_indices = @transform_0, window_bounds = array<i64: 8, 32>}, {pipeline_mode = #tpu.pipeline_mode<synchronous>, transform_indices = @transform_1, window_bounds = array<i64: 32, 128>}, {pipeline_mode = #tpu.pipeline_mode<synchronous>, transform_indices = @transform_2, window_bounds = array<i64: 2, 128, 128>}, {pipeline_mode = #tpu.pipeline_mode<synchronous>, transform_indices = @transform_3, window_bounds = array<i64: 3, 1, 128>}, {transform_indices = @transform_4, window_bounds = array<i64: 8, 16>}]} {
    %c0 = arith.constant 0 : index
    %c0_0 = arith.constant 0 : index
    %0 = vector.load %arg1[%c0, %c0_0] : memref<8x32xbf16, #tpu.memory_space<vmem>>, vector<8x32xbf16>
    %c0_1 = arith.constant 0 : index
    %c0_2 = arith.constant 0 : index
    %1 = vector.load %arg2[%c0_1, %c0_2] : memref<32x128xbf16, #tpu.memory_space<vmem>>, vector<32x128xbf16>
    %cst = arith.constant dense<0.000000e+00> : vector<8x128xf32>
    %2 = tpu.matmul %0, %1, %cst {dimension_numbers = #tpu.dot_dimension_numbers<[1], [0], [0], [1], [0, 0, 1, 1], [], []>} : vector<8x32xbf16>, vector<32x128xbf16>, vector<8x128xf32> -> vector<8x128xf32>
    %c0_3 = arith.constant 0 : index
    %c0_4 = arith.constant 0 : index
    %c0_5 = arith.constant 0 : index
    %3 = vector.load %arg4[%c0_3, %c0_4, %c0_5] : memref<3x1x128xf32, #tpu.memory_space<vmem>>, vector<1x1x128xf32>
    %4 = vector.shape_cast %3 : vector<1x1x128xf32> to vector<1x128xf32>
    %5 = vector.broadcast %4 : vector<1x128xf32> to vector<8x128xf32>
    %6 = arith.addf %2, %5 : vector<8x128xf32>
    %cst_6 = arith.constant 0.00999999977 : f32
    %7 = vector.broadcast %cst_6 : f32 to vector<8x128xf32>
    %8 = arith.mulf %7, %6 : vector<8x128xf32>
    %9 = arith.maximumf %6, %8 : vector<8x128xf32>
    %10 = arith.truncf %9 : vector<8x128xf32> to vector<8x128xbf16>
    %c0_7 = arith.constant 0 : index
    %c0_8 = arith.constant 0 : index
    %c0_9 = arith.constant 0 : index
    %11 = vector.load %arg3[%c0_7, %c0_8, %c0_9] : memref<2x128x128xbf16, #tpu.memory_space<vmem>>, vector<1x128x128xbf16>
    %12 = vector.shape_cast %11 : vector<1x128x128xbf16> to vector<128x128xbf16>
    %cst_10 = arith.constant dense<0.000000e+00> : vector<8x128xf32>
    %13 = tpu.matmul %10, %12, %cst_10 {dimension_numbers = #tpu.dot_dimension_numbers<[1], [0], [0], [1], [0, 0, 1, 1], [], []>} : vector<8x128xbf16>, vector<128x128xbf16>, vector<8x128xf32> -> vector<8x128xf32>
    %c1 = arith.constant 1 : index
    %c0_11 = arith.constant 0 : index
    %c0_12 = arith.constant 0 : index
    %14 = vector.load %arg4[%c1, %c0_11, %c0_12] : memref<3x1x128xf32, #tpu.memory_space<vmem>>, vector<1x1x128xf32>
    %15 = vector.shape_cast %14 : vector<1x1x128xf32> to vector<1x128xf32>
    %16 = vector.broadcast %15 : vector<1x128xf32> to vector<8x128xf32>
    %17 = arith.addf %13, %16 : vector<8x128xf32>
    %cst_13 = arith.constant 0.000000e+00 : f32
    %18 = vector.broadcast %cst_13 : f32 to vector<8x128xf32>
    %19 = arith.maximumf %17, %18 : vector<8x128xf32>
    %20 = arith.truncf %19 : vector<8x128xf32> to vector<8x128xbf16>
    %c1_14 = arith.constant 1 : index
    %c0_15 = arith.constant 0 : index
    %c0_16 = arith.constant 0 : index
    %21 = vector.load %arg3[%c1_14, %c0_15, %c0_16] : memref<2x128x128xbf16, #tpu.memory_space<vmem>>, vector<1x128x128xbf16>
    %22 = vector.shape_cast %21 : vector<1x128x128xbf16> to vector<128x128xbf16>
    %cst_17 = arith.constant dense<0.000000e+00> : vector<8x128xf32>
    %23 = tpu.matmul %20, %22, %cst_17 {dimension_numbers = #tpu.dot_dimension_numbers<[1], [0], [0], [1], [0, 0, 1, 1], [], []>} : vector<8x128xbf16>, vector<128x128xbf16>, vector<8x128xf32> -> vector<8x128xf32>
    %c2 = arith.constant 2 : index
    %c0_18 = arith.constant 0 : index
    %c0_19 = arith.constant 0 : index
    %24 = vector.load %arg4[%c2, %c0_18, %c0_19] : memref<3x1x128xf32, #tpu.memory_space<vmem>>, vector<1x1x128xf32>
    %25 = vector.shape_cast %24 : vector<1x1x128xf32> to vector<1x128xf32>
    %26 = vector.broadcast %25 : vector<1x128xf32> to vector<8x128xf32>
    %27 = arith.addf %23, %26 : vector<8x128xf32>
    %28 = vector.extract_strided_slice %27 {offsets = [0, 0], sizes = [8, 16], strides = [1, 1]} : vector<8x128xf32> to vector<8x16xf32>
    %c0_20 = arith.constant 0 : index
    %c0_21 = arith.constant 0 : index
    %29 = vector.load %arg5[%c0_20, %c0_21] : memref<8x16xf32, #tpu.memory_space<vmem>>, vector<8x16xf32>
    tpu.vector_store %arg5[%c0_20, %c0_21], %28 {strides = array<i32>} : memref<8x16xf32, #tpu.memory_space<vmem>>, vector<8x16xf32>,
    return
  }
  func.func @transform_0(%arg0: i32) -> (i32, i32) {
    %c0_i32 = arith.constant 0 : i32
    %c0_i32_0 = arith.constant 0 : i32
    return %arg0, %c0_i32 : i32, i32
  }
  func.func @transform_1(%arg0: i32) -> (i32, i32) {
    %c0_i32 = arith.constant 0 : i32
    %c0_i32_0 = arith.constant 0 : i32
    %c0_i32_1 = arith.constant 0 : i32
    return %c0_i32, %c0_i32_0 : i32, i32
  }
  func.func @transform_2(%arg0: i32) -> (i32, i32, i32) {
    %c0_i32 = arith.constant 0 : i32
    %c0_i32_0 = arith.constant 0 : i32
    %c0_i32_1 = arith.constant 0 : i32
    %c0_i32_2 = arith.constant 0 : i32
    return %c0_i32, %c0_i32_0, %c0_i32_1 : i32, i32, i32
  }
  func.func @transform_3(%arg0: i32) -> (i32, i32, i32) {
    %c0_i32 = arith.constant 0 : i32
    %c0_i32_0 = arith.constant 0 : i32
    %c0_i32_1 = arith.constant 0 : i32
    %c0_i32_2 = arith.constant 0 : i32
    return %c0_i32, %c0_i32_0, %c0_i32_1 : i32, i32, i32
  }
  func.func @transform_4(%arg0: i32) -> (i32, i32) {
    %c0_i32 = arith.constant 0 : i32
    %c0_i32_0 = arith.constant 0 : i32
    return %arg0, %c0_i32 : i32, i32
  }
}

</mosaic_0001>

<llo_original>
// kernel: tpu_custom_call.1
$region0: #{tpu_custom_call.1}
  #allocation0 [shape = 'u32[]', space=smem, size = 0x4, offset = 0x4, fixed_abs, tag = 'smem constant byte address 0x4 - core index']
  #allocation1 [shape = 'u32[144,128]{1,0:T(1,128)}', space=vmem, size = 0x12000, scoped, tag = 'internal scratch']
  %s0 = inlined_call_operand.hbm [shape: bf16[8,32], index: 0, kind: input, shape index: {}]
  %s1 = inlined_call_operand.hbm [shape: bf16[32,128], index: 1, kind: input, shape index: {}]
  %s2 = inlined_call_operand.hbm [shape: bf16[2,128,128], index: 2, kind: input, shape index: {}]
  %s3 = inlined_call_operand.vmem [shape: f32[3,1,128], index: 3, kind: input, shape index: {}]
  %s4 = inlined_call_operand.hbm [shape: f32[8,16], index: 4, kind: output, shape index: {}]
  %s5 = sld [smem:[#allocation0]]
  $region38: #{tpu_custom_call.1} parent=0
    _
  %s7 = ssub.s32 1, %s5
  %s8 = scalar_select 0, %s7, %s5
  $region1: #{tpu_custom_call.1} parent=0
    #allocation2 [shape = 'u8[2048]{0}', space=vmem, size = 0x800, scoped, tag = 'input window, operand 0, single buffered']
    #allocation3 [shape = 's32[1]{0}', space=sflag, size = 0x4, scoped, tag = 'scoped memory for tpu_custom_call.1']
    #allocation4 [shape = 's32[1]{0}', space=sflag, size = 0x4, scoped, tag = 'scoped memory for tpu_custom_call.1']
    #allocation5 [shape = 'u8[8192]{0}', space=vmem, size = 0x2000, scoped, tag = 'input window, operand 1, single buffered']
    #allocation6 [shape = 's32[1]{0}', space=sflag, size = 0x4, scoped, tag = 'scoped memory for tpu_custom_call.1']
    #allocation7 [shape = 'u8[65536]{0}', space=vmem, size = 0x10000, scoped, tag = 'input window, operand 2, single buffered']
    #allocation8 [shape = 'u8[4096]{0}', space=vmem, size = 0x1000, scoped, tag = 'output window, operand 0, single buffered']
    %9 = vsyncpa [#allocation3], 0
    %10 = vsyncpa [#allocation6], 0
    %11 = vsyncpa [#allocation4], 0
    // Predicated region
    $region2: #{tpu_custom_call.1} parent=1 // pred_check
      _
    $region3: #{tpu_custom_call.1} parent=1 // pred_check_branch
      %13 = sbr.rel (0) target = $region5
    $region4: #{tpu_custom_call.1} parent=1 // pred_region
      %s15 = ssub.s32 64, 64
      %16 = vsyncadd [#allocation3], %s15
      %s18 = sshll.u32 [#allocation2], 4
      %s19 = int_to_ptr.vmem [resolvable:$true] %s18
      %21 = dma.hbm_to_vmem [thread:$0]  %s0, 64, %s19, [#allocation3]
    $region5: #{tpu_custom_call.1} parent=1 // pred_fallthru
      _
    // Predicated region
    $region6: #{tpu_custom_call.1} parent=1 // pred_check
      _
    $region7: #{tpu_custom_call.1} parent=1 // pred_check_branch
      %23 = sbr.rel (0) target = $region9
    $region8: #{tpu_custom_call.1} parent=1 // pred_region
      %s25 = ssub.s32 256, 256
      %26 = vsyncadd [#allocation6], %s25
      %s27 = sshll.u32 [#allocation5], 4
      %s28 = int_to_ptr.vmem [resolvable:$true] %s27
      %33 = dma.hbm_to_vmem [thread:$0]  %s1, 256, %s28, [#allocation6], 64, 64, 4
    $region9: #{tpu_custom_call.1} parent=1 // pred_fallthru
      _
    // Predicated region
    $region10: #{tpu_custom_call.1} parent=1 // pred_check
      _
    $region11: #{tpu_custom_call.1} parent=1 // pred_check_branch
      %35 = sbr.rel (0) target = $region13
    $region12: #{tpu_custom_call.1} parent=1 // pred_region
      %s37 = ssub.s32 2048, 2048
      %38 = vsyncadd [#allocation6], %s37
      %s39 = sshll.u32 [#allocation7], 4
      %s40 = int_to_ptr.vmem [resolvable:$true] %s39
      %45 = dma.hbm_to_vmem [thread:$0]  %s2, 2048, %s40, [#allocation6], 64, 64, 4
    $region13: #{tpu_custom_call.1} parent=1 // pred_fallthru
      _
    // Predicated region
    $region14: #{tpu_custom_call.1} parent=1 // pred_check
      _
    $region15: #{tpu_custom_call.1} parent=1 // pred_check_branch
      %47 = sbr.rel (0) target = $region17
    $region16: #{tpu_custom_call.1} parent=1 // pred_region
      _
    $region17: #{tpu_custom_call.1} parent=1 // pred_fallthru
      _
    // Predicated region
    $region18: #{tpu_custom_call.1} parent=1 // pred_check
      _
    $region19: #{tpu_custom_call.1} parent=1 // pred_check_branch
      %49 = sbr.rel (0) target = $region21
    $region20: #{tpu_custom_call.1} parent=1 // pred_region
      %50 = dma.done [#allocation3], 64
    $region21: #{tpu_custom_call.1} parent=1 // pred_fallthru
      _
    // Predicated region
    $region22: #{tpu_custom_call.1} parent=1 // pred_check
      _
    $region23: #{tpu_custom_call.1} parent=1 // pred_check_branch
      %52 = sbr.rel (0) target = $region25
    $region24: #{tpu_custom_call.1} parent=1 // pred_region
      %53 = dma.done [#allocation6], 256
    $region25: #{tpu_custom_call.1} parent=1 // pred_fallthru
      _
    // Predicated region
    $region26: #{tpu_custom_call.1} parent=1 // pred_check
      _
    $region27: #{tpu_custom_call.1} parent=1 // pred_check_branch
      %55 = sbr.rel (0) target = $region29
    $region28: #{tpu_custom_call.1} parent=1 // pred_region
      %56 = dma.done [#allocation6], 2048
    $region29: #{tpu_custom_call.1} parent=1 // pred_fallthru
      _
    %v58 = vld [vmem:[#allocation2] sm:$0xf]
    %v59 = vld [vmem:[#allocation5] sm:$0xf]
    %v60 = vld [vmem:[#allocation5 + $0x4] sm:$0xf]
    %v61 = vld [vmem:[#allocation5 + $0x8] sm:$0xf]
    %v62 = vld [vmem:[#allocation5 + $0xc] sm:$0xf]
    %v63 = vld [vmem:[%s3] sm:$0x1]
    %v65 = vlaneseq
    %v66 = vshrl.u32 %v65, 7
    %v67 = vsub.s32 0, %v66
    %v68 = vrot.slane %v63, %v67
    %v74 = vunpack.c.l.b16 %v59
    %v75 = vunpack.c.l.b16 %v60
    %v76 = vunpack.c.l.b16 %v61
    %v77 = vunpack.c.l.b16 %v62
    %v78 = vpack.c.b16 %v75, %v74
    %v79 = vpack.c.b16 %v77, %v76
    %vm82 = vcmask 261120
    %v84 = vsel %vm82, %v58, 0
    %86 = vmatprep.subr.bf16.mxu0 0
    %87 = vmatpush1.bf16.msra.mxu0 %v78
    %88 = vmatprep.subr.bf16.mxu0 0
    %89 = vmatpush1.bf16.msra.mxu0 %v79
    %90 = vmatprep.subr.bf16.mxu0 0
    %91 = vmatpush1.bf16.msra.mxu0 0
    %92 = vmatprep.subr.bf16.mxu0 0
    %93 = vmatpush1.bf16.msra.mxu0 0
    %94 = vmatprep.subr.bf16.mxu0 0
    %95 = vmatpush1.bf16.msra.mxu0 0
    %96 = vmatprep.subr.bf16.mxu0 0
    %97 = vmatpush1.bf16.msra.mxu0 0
    %98 = vmatprep.subr.bf16.mxu0 0
    %99 = vmatpush1.bf16.msra.mxu0 0
    %100 = vmatprep.subr.bf16.mxu0 0
    %101 = vmatpush1.bf16.msra.mxu0 0
    %102 = vmatprep.subr.bf16.mxu0 0
    %103 = vmatpush1.bf16.msra.mxu0 0
    %104 = vmatprep.subr.bf16.mxu0 0
    %105 = vmatpush1.bf16.msra.mxu0 0
    %106 = vmatprep.subr.bf16.mxu0 0
    %107 = vmatpush1.bf16.msra.mxu0 0
    %108 = vmatprep.subr.bf16.mxu0 0
    %109 = vmatpush1.bf16.msra.mxu0 0
    %110 = vmatprep.subr.bf16.mxu0 0
    %111 = vmatpush1.bf16.msra.mxu0 0
    %112 = vmatprep.subr.bf16.mxu0 0
    %113 = vmatpush1.bf16.msra.mxu0 0
    %114 = vmatprep.subr.bf16.mxu0 0
    %115 = vmatpush1.bf16.msra.mxu0 0
    %116 = vmatprep.subr.bf16.mxu0 0
    %117 = vmatpush1.bf16.msra.mxu0 0
    %118 = vmatprep.mubr.bf16.mxu0 0
    %119 = vmatmul.mubr.bf16.gmra.mrb[0].mxu0 %v84
    %v120 = vpop.f32.mrb[0].mxu0
    %v121 = vadd.f32 %v68, %v120
    %v122 = vpop.f32.mrb[0].mxu0
    %v123 = vpop.f32.mrb[0].mxu0
    %v124 = vpop.f32.mrb[0].mxu0
    %125 = vdwg.mxu0
    %v126 = vmul.f32 %v121, 0.01
    %v127 = vmax.f32 %v121, %v126
    %v128 = vpack.c.bf16 %v127, %v127
    %v129 = vld [vmem:[#allocation7] sm:$0xf]
    %v130 = vld [vmem:[#allocation7 + $0x4] sm:$0xf]
    %v131 = vld [vmem:[#allocation7 + $0x8] sm:$0xf]
    %v132 = vld [vmem:[#allocation7 + $0xc] sm:$0xf]
    %v133 = vld [vmem:[#allocation7 + $0x10] sm:$0xf]
    %v134 = vld [vmem:[#allocation7 + $0x14] sm:$0xf]
    %v135 = vld [vmem:[#allocation7 + $0x18] sm:$0xf]
    %v136 = vld [vmem:[#allocation7 + $0x1c] sm:$0xf]
    %v137 = vld [vmem:[#allocation7 + $0x20] sm:$0xf]
    %v138 = vld [vmem:[#allocation7 + $0x24] sm:$0xf]
    %v139 = vld [vmem:[#allocation7 + $0x28] sm:$0xf]
    %v140 = vld [vmem:[#allocation7 + $0x2c] sm:$0xf]
    %v141 = vld [vmem:[#allocation7 + $0x30] sm:$0xf]
    %v142 = vld [vmem:[#allocation7 + $0x34] sm:$0xf]
    %v143 = vld [vmem:[#allocation7 + $0x38] sm:$0xf]
    %v144 = vld [vmem:[#allocation7 + $0x3c] sm:$0xf]
    %s145 = scalar_lea.vmem %s3, 1
    %v146 = vld [vmem:[%s145] sm:$0x1]
    %v148 = vlaneseq
    %v149 = vshrl.u32 %v148, 7
    %v150 = vsub.s32 0, %v149
    %v151 = vrot.slane %v146, %v150
    %v169 = vunpack.c.l.b16 %v129
    %v170 = vunpack.c.l.b16 %v130
    %v171 = vunpack.c.l.b16 %v131
    %v172 = vunpack.c.l.b16 %v132
    %v173 = vunpack.c.l.b16 %v133
    %v174 = vunpack.c.l.b16 %v134
    %v175 = vunpack.c.l.b16 %v135
    %v176 = vunpack.c.l.b16 %v136
    %v177 = vunpack.c.l.b16 %v137
    %v178 = vunpack.c.l.b16 %v138
    %v179 = vunpack.c.l.b16 %v139
    %v180 = vunpack.c.l.b16 %v140
    %v181 = vunpack.c.l.b16 %v141
    %v182 = vunpack.c.l.b16 %v142
    %v183 = vunpack.c.l.b16 %v143
    %v184 = vunpack.c.l.b16 %v144
    %v185 = vpack.c.b16 %v170, %v169
    %v186 = vpack.c.b16 %v172, %v171
    %v187 = vpack.c.b16 %v174, %v173
    %v188 = vpack.c.b16 %v176, %v175
    %v189 = vpack.c.b16 %v178, %v177
    %v190 = vpack.c.b16 %v180, %v179
    %v191 = vpack.c.b16 %v182, %v181
    %v192 = vpack.c.b16 %v184, %v183
    %201 = vmatprep.subr.bf16.mxu0 0
    %202 = vmatpush1.bf16.msra.mxu0 %v185
    %203 = vmatprep.subr.bf16.mxu0 0
    %204 = vmatpush1.bf16.msra.mxu0 %v186
    %205 = vmatprep.subr.bf16.mxu0 0
    %206 = vmatpush1.bf16.msra.mxu0 %v187
    %207 = vmatprep.subr.bf16.mxu0 0
    %208 = vmatpush1.bf16.msra.mxu0 %v188
    %209 = vmatprep.subr.bf16.mxu0 0
    %210 = vmatpush1.bf16.msra.mxu0 %v189
    %211 = vmatprep.subr.bf16.mxu0 0
    %212 = vmatpush1.bf16.msra.mxu0 %v190
    %213 = vmatprep.subr.bf16.mxu0 0
    %214 = vmatpush1.bf16.msra.mxu0 %v191
    %215 = vmatprep.subr.bf16.mxu0 0
    %216 = vmatpush1.bf16.msra.mxu0 %v192
    %217 = vmatprep.subr.bf16.mxu0 0
    %218 = vmatpush1.bf16.msra.mxu0 0
    %219 = vmatprep.subr.bf16.mxu0 0
    %220 = vmatpush1.bf16.msra.mxu0 0
    %221 = vmatprep.subr.bf16.mxu0 0
    %222 = vmatpush1.bf16.msra.mxu0 0
    %223 = vmatprep.subr.bf16.mxu0 0
    %224 = vmatpush1.bf16.msra.mxu0 0
    %225 = vmatprep.subr.bf16.mxu0 0
    %226 = vmatpush1.bf16.msra.mxu0 0
    %227 = vmatprep.subr.bf16.mxu0 0
    %228 = vmatpush1.bf16.msra.mxu0 0
    %229 = vmatprep.subr.bf16.mxu0 0
    %230 = vmatpush1.bf16.msra.mxu0 0
    %231 = vmatprep.subr.bf16.mxu0 0
    %232 = vmatpush1.bf16.msra.mxu0 0
    %233 = vmatprep.mubr.bf16.mxu0 0
    %234 = vmatmul.mubr.bf16.gmra.mrb[0].mxu0 %v128
    %v235 = vpop.f32.mrb[0].mxu0
    %v236 = vadd.f32 %v151, %v235
    %v237 = vpop.f32.mrb[0].mxu0
    %v238 = vpop.f32.mrb[0].mxu0
    %v239 = vpop.f32.mrb[0].mxu0
    %240 = vdwg.mxu0
    %v241 = vmax.f32 %v236, 0.0
    %v242 = vpack.c.bf16 %v241, %v241
    %s243 = scalar_lea.vmem [#allocation7], 64
    %v244 = vld [vmem:[%s243] sm:$0xf]
    %v245 = vld [vmem:[%s243 + $0x4] sm:$0xf]
    %v246 = vld [vmem:[%s243 + $0x8] sm:$0xf]
    %v247 = vld [vmem:[%s243 + $0xc] sm:$0xf]
    %v248 = vld [vmem:[%s243 + $0x10] sm:$0xf]
    %v249 = vld [vmem:[%s243 + $0x14] sm:$0xf]
    %v250 = vld [vmem:[%s243 + $0x18] sm:$0xf]
    %v251 = vld [vmem:[%s243 + $0x1c] sm:$0xf]
    %v252 = vld [vmem:[%s243 + $0x20] sm:$0xf]
    %v253 = vld [vmem:[%s243 + $0x24] sm:$0xf]
    %v254 = vld [vmem:[%s243 + $0x28] sm:$0xf]
    %v255 = vld [vmem:[%s243 + $0x2c] sm:$0xf]
    %v256 = vld [vmem:[%s243 + $0x30] sm:$0xf]
    %v257 = vld [vmem:[%s243 + $0x34] sm:$0xf]
    %v258 = vld [vmem:[%s243 + $0x38] sm:$0xf]
    %v259 = vld [vmem:[%s243 + $0x3c] sm:$0xf]
    %s260 = scalar_lea.vmem %s3, 2
    %v261 = vld [vmem:[%s260] sm:$0x1]
    %v263 = vlaneseq
    %v264 = vshrl.u32 %v263, 7
    %v265 = vsub.s32 0, %v264
    %v266 = vrot.slane %v261, %v265
    %v284 = vunpack.c.l.b16 %v244
    %v285 = vunpack.c.l.b16 %v245
    %v286 = vunpack.c.l.b16 %v246
    %v287 = vunpack.c.l.b16 %v247
    %v288 = vunpack.c.l.b16 %v248
    %v289 = vunpack.c.l.b16 %v249
    %v290 = vunpack.c.l.b16 %v250
    %v291 = vunpack.c.l.b16 %v251
    %v292 = vunpack.c.l.b16 %v252
    %v293 = vunpack.c.l.b16 %v253
    %v294 = vunpack.c.l.b16 %v254
    %v295 = vunpack.c.l.b16 %v255
    %v296 = vunpack.c.l.b16 %v256
    %v297 = vunpack.c.l.b16 %v257
    %v298 = vunpack.c.l.b16 %v258
    %v299 = vunpack.c.l.b16 %v259
    %v300 = vpack.c.b16 %v285, %v284
    %v301 = vpack.c.b16 %v287, %v286
    %v302 = vpack.c.b16 %v289, %v288
    %v303 = vpack.c.b16 %v291, %v290
    %v304 = vpack.c.b16 %v293, %v292
    %v305 = vpack.c.b16 %v295, %v294
    %v306 = vpack.c.b16 %v297, %v296
    %v307 = vpack.c.b16 %v299, %v298
    %316 = vmatprep.subr.bf16.mxu0 0
    %317 = vmatpush1.bf16.msra.mxu0 %v300
    %318 = vmatprep.subr.bf16.mxu0 0
    %319 = vmatpush1.bf16.msra.mxu0 %v301
    %320 = vmatprep.subr.bf16.mxu0 0
    %321 = vmatpush1.bf16.msra.mxu0 %v302
    %322 = vmatprep.subr.bf16.mxu0 0
    %323 = vmatpush1.bf16.msra.mxu0 %v303
    %324 = vmatprep.subr.bf16.mxu0 0
    %325 = vmatpush1.bf16.msra.mxu0 %v304
    %326 = vmatprep.subr.bf16.mxu0 0
    %327 = vmatpush1.bf16.msra.mxu0 %v305
    %328 = vmatprep.subr.bf16.mxu0 0
    %329 = vmatpush1.bf16.msra.mxu0 %v306
    %330 = vmatprep.subr.bf16.mxu0 0
    %331 = vmatpush1.bf16.msra.mxu0 %v307
    %332 = vmatprep.subr.bf16.mxu0 0
    %333 = vmatpush1.bf16.msra.mxu0 0
    %334 = vmatprep.subr.bf16.mxu0 0
    %335 = vmatpush1.bf16.msra.mxu0 0
    %336 = vmatprep.subr.bf16.mxu0 0
    %337 = vmatpush1.bf16.msra.mxu0 0
    %338 = vmatprep.subr.bf16.mxu0 0
    %339 = vmatpush1.bf16.msra.mxu0 0
    %340 = vmatprep.subr.bf16.mxu0 0
    %341 = vmatpush1.bf16.msra.mxu0 0
    %342 = vmatprep.subr.bf16.mxu0 0
    %343 = vmatpush1.bf16.msra.mxu0 0
    %344 = vmatprep.subr.bf16.mxu0 0
    %345 = vmatpush1.bf16.msra.mxu0 0
    %346 = vmatprep.subr.bf16.mxu0 0
    %347 = vmatpush1.bf16.msra.mxu0 0
    %348 = vmatprep.mubr.bf16.mxu0 0
    %349 = vmatmul.mubr.bf16.gmra.mrb[0].mxu0 %v242
    %v350 = vpop.f32.mrb[0].mxu0
    %v351 = vadd.f32 %v266, %v350
    %v352 = vpop.f32.mrb[0].mxu0
    %v353 = vpop.f32.mrb[0].mxu0
    %v354 = vpop.f32.mrb[0].mxu0
    %355 = vdwg.mxu0
    %vm356 = vcmask 130048
    %357 = vst.msk [vmem:[#allocation8] sm:$0xff] %vm356, %v351
    // Predicated region
    $region30: #{tpu_custom_call.1} parent=1 // pred_check
      _
    $region31: #{tpu_custom_call.1} parent=1 // pred_check_branch
      %359 = sbr.rel (0) target = $region33
    $region32: #{tpu_custom_call.1} parent=1 // pred_region
      %s361 = ssub.s32 128, 128
      %362 = vsyncadd [#allocation4], %s361
      %s364 = sshll.u32 [#allocation8], 4
      %s365 = int_to_ptr.vmem [resolvable:$true] %s364
      %367 = dma.vmem_to_hbm [thread:$0]  %s365, 128, %s4, [#allocation4]
    $region33: #{tpu_custom_call.1} parent=1 // pred_fallthru
      _
    // Predicated region
    $region34: #{tpu_custom_call.1} parent=1 // pred_check
      _
    $region35: #{tpu_custom_call.1} parent=1 // pred_check_branch
      %369 = sbr.rel (0) target = $region37
    $region36: #{tpu_custom_call.1} parent=1 // pred_region
      %370 = dma.done [#allocation4], 128
    $region37: #{tpu_custom_call.1} parent=1 // pred_fallthru
      _
    %371 = vsyncpa [#allocation3], 1
    %372 = vsyncpa [#allocation6], 1
    %373 = vsyncpa [#allocation4], 1

</llo_original>
